<compile_context>
chip_gen: v6e
topology: v6e:2x2x1
jax: 0.10.0
libtpu: 0.0.40
codegen_flags: <defaults>
</compile_context>

<pallas_src>
import functools

import jax
import jax.numpy as jnp
from jax.experimental import pallas as pl
from jax.experimental.pallas import tpu as pltpu

_MiB = 1024 * 1024


def _round_up(x, m):
    return ((x + m - 1) // m) * m


def _sublane_granule(itemsize):
    # f32 -> 8, bf16 -> 16, int8/fp8 -> 32 rows per VMEM tile.
    return max(8, 32 // max(1, itemsize))


def _pick_lane_tile(hw_pad, rows_eff, itemsize, target_block_bytes):
    """Largest multiple-of-128 divisor of hw_pad such that one
    (rows_eff, tile) block is <= target_block_bytes (floor: 128 lanes)."""
    assert hw_pad % 128 == 0, hw_pad
    max_lanes = (target_block_bytes // max(1, rows_eff * itemsize)) // 128 * 128
    max_lanes = max(128, min(max_lanes, hw_pad))
    tl = max_lanes
    while tl > 128:
        if hw_pad % tl == 0:
            return tl
        tl -= 128
    return 128


def _se_pool_gates_kernel(ev_ref, wt_ref, b_ref, w0_ref, w1_ref, acc_ref, *,
                          inv_hw, channels):
    """Streamed global average pool of ev + both SE heads (fused 1x1 conv +
    sigmoid) applied once in the last grid step."""
    j = pl.program_id(0)

    @pl.when(j == 0)
    def _init():
        acc_ref[...] = jnp.zeros_like(acc_ref)

    # Steady state: pure VALU adds into a block-shaped f32 accumulator
    # (cross-lane reduce deferred to the finalize step).
    acc_ref[...] += ev_ref[...].astype(jnp.float32)

    @pl.when(j == pl.num_programs(0) - 1)
    def _finalize():
        # Single XLU cross-lane reduce over the accumulated block -> (N, C).
        pooled = jnp.sum(acc_ref[...], axis=-1) * inv_hw
        wt = wt_ref[...]                              # (C, 2C) = [head0 | head1]
        if channels <= 32:
            # Tiny C: VPU broadcast-multiply-sum; skip MXU warm-up entirely.
            z = b_ref[...]                            # (1, 2C), broadcasts to (N, 2C)
            for c in range(channels):
                z = z + pooled[:, c:c + 1] * wt[c:c + 1, :]
        else:
            z = jnp.dot(pooled, wt,
                        preferred_element_type=jnp.float32) + b_ref[...]
        gates = 1.0 / (1.0 + jnp.exp(-z))             # (N, 2C)
        w0_ref[...] = gates[:, :channels].astype(w0_ref.dtype)
        w1_ref[...] = gates[:, channels:].astype(w1_ref.dtype)


def _fusion_kernel(f0_ref, f1_ref, w0_ref, w1_ref, o_ref):
    """out = feat_0 * w0 + feat_1 * w1 in the feature-map dtype; gates are
    (N*C, 1) and lane-broadcast over the spatial axis."""
    o_ref[...] = f0_ref[...] * w0_ref[...] + f1_ref[...] * w1_ref[...]


def img_ev_fusion_forward(ev, feat_0, feat_1, se0_weight, se0_bias,
                          se1_weight, se1_bias, *, lane_tile=None,
                          target_block_bytes=4 * _MiB):
    """Forward pass of img_ev_fusion (the 'add' fusion path).

    ev, feat_0, feat_1 : (N, C, H, W)
    se{0,1}_weight     : (C, C, 1, 1)  PyTorch OIHW conv1x1 weights
    se{0,1}_bias       : (C,)
    """
    N, C, H, W = ev.shape
    assert feat_0.shape == ev.shape and feat_1.shape == ev.shape
    assert se0_weight.shape[:2] == (C, C) and se1_weight.shape[:2] == (C, C)
    HW = H * W
    HW_pad = _round_up(HW, 128)
    NC = N * C

    ev_it = jnp.dtype(ev.dtype).itemsize
    ft_dtype = feat_0.dtype
    ft_it = jnp.dtype(ft_dtype).itemsize

    # Lane-dense, reshape-only layouts (no transposes).
    ev3 = ev.reshape(N, C, HW)          # pooling pass keeps (N, C, HW)
    f02 = feat_0.reshape(NC, HW)        # fusion pass packs N*C on sublanes
    f12 = feat_1.reshape(NC, HW)
    if HW_pad != HW:
        pad = HW_pad - HW
        ev3 = jnp.pad(ev3, ((0, 0), (0, 0), (0, pad)))   # zeros -> exact mean
        f02 = jnp.pad(f02, ((0, 0), (0, pad)))
        f12 = jnp.pad(f12, ((0, 0), (0, pad)))

    # Effective sublane-padded row counts (what a VMEM block really costs).
    rows1 = N * _round_up(C, _sublane_granule(ev_it))
    rows2 = _round_up(NC, _sublane_granule(ft_it))

    if lane_tile is None:
        lt1 = _pick_lane_tile(HW_pad, rows1, ev_it, target_block_bytes)
        lt2 = _pick_lane_tile(HW_pad, rows2, ft_it, target_block_bytes)
    else:
        assert HW_pad % lane_tile == 0, (HW_pad, lane_tile)
        lt1 = lt2 = lane_tile
    n1 = HW_pad // lt1
    n2 = HW_pad // lt2

    # Scoped-VMEM budgets: double-buffered streams + scratch, >= 32 MiB so the
    # working set also fits on v5e (16 MiB scoped default); stays < v7x's
    # 64 MiB physical VMEM with the default 4 MiB block target.
    blk1 = rows1 * lt1 * ev_it
    blk2 = rows2 * lt2 * ft_it
    vmem1 = int(max(32 * _MiB, 2 * blk1 + rows1 * lt1 * 4 + 4 * _MiB))
    vmem2 = int(max(32 * _MiB, 6 * blk2 + 4 * _MiB))

    # conv1x1 weights for both heads fused into one (Cin, 2*Cout) matrix.
    wt = jnp.concatenate(
        [se0_weight.reshape(C, C).T, se1_weight.reshape(C, C).T],
        axis=1).astype(jnp.float32)                       # (C, 2C)
    bb = jnp.concatenate([se0_bias, se1_bias]).reshape(1, 2 * C).astype(jnp.float32)

    # ---- Kernel 1: streamed global avg-pool of ev + fused SE heads. ----
    se_kernel = functools.partial(_se_pool_gates_kernel,
                                  inv_hw=1.0 / HW, channels=C)
    w0, w1 = pl.pallas_call(
        se_kernel,
        out_shape=(jax.ShapeDtypeStruct((N, C), jnp.float32),
                   jax.ShapeDtypeStruct((N, C), jnp.float32)),
        grid=(n1,),
        in_specs=[
            pl.BlockSpec((N, C, lt1), lambda j: (0, 0, j)),
            pl.BlockSpec((C, 2 * C), lambda j: (0, 0)),
            pl.BlockSpec((1, 2 * C), lambda j: (0, 0)),
        ],
        out_specs=(pl.BlockSpec((N, C), lambda j: (0, 0)),
                   pl.BlockSpec((N, C), lambda j: (0, 0))),
        scratch_shapes=[pltpu.VMEM((N, C, lt1), jnp.float32)],
        compiler_params=pltpu.CompilerParams(
            dimension_semantics=("arbitrary",),      # carries pool accumulator
            vmem_limit_bytes=vmem1),
        cost_estimate=pl.CostEstimate(
            flops=int(N * C * HW_pad + 4 * N * C * C),
            transcendentals=int(2 * N * C),
            bytes_accessed=int(N * C * HW_pad * ev_it)),
    )(ev3, wt, bb)

    # ---- Kernel 2: gated add of the two feature maps (flattened 2-D). ----
    w0f = w0.reshape(NC, 1).astype(ft_dtype)   # cast once; bf16 stays bf16
    w1f = w1.reshape(NC, 1).astype(ft_dtype)
    out2 = pl.pallas_call(
        _fusion_kernel,
        out_shape=jax.ShapeDtypeStruct((NC, HW_pad), ft_dtype),
        grid=(n2,),
        in_specs=[
            pl.BlockSpec((NC, lt2), lambda j: (0, j)),
            pl.BlockSpec((NC, lt2), lambda j: (0, j)),
            pl.BlockSpec((NC, 1), lambda j: (0, 0)),   # resident gate w0
            pl.BlockSpec((NC, 1), lambda j: (0, 0)),   # resident gate w1
        ],
        out_specs=pl.BlockSpec((NC, lt2), lambda j: (0, j)),
        compiler_params=pltpu.CompilerParams(
            dimension_semantics=("parallel",),         # megacore-shardable
            vmem_limit_bytes=vmem2),
        cost_estimate=pl.CostEstimate(
            flops=int(3 * NC * HW_pad),
            transcendentals=0,
            bytes_accessed=int(3 * NC * HW_pad * ft_it)),
    )(f02, f12, w0f, w1f)

    if HW_pad != HW:
        out2 = out2[:, :HW]
    return out2.reshape(N, C, H, W)


def _reference(ev, feat_0, feat_1, w0_conv, b0, w1_conv, b1):
    N, C = ev.shape[:2]
    pooled = jnp.mean(ev, axis=(2, 3))                         # (N, C)
    z0 = pooled @ w0_conv.reshape(C, C).T + b0[None, :]
    z1 = pooled @ w1_conv.reshape(C, C).T + b1[None, :]
    g0 = jax.nn.sigmoid(z0)[:, :, None, None]
    g1 = jax.nn.sigmoid(z1)[:, :, None, None]
    return feat_0 * g0 + feat_1 * g1


if __name__ == "__main__":
    key = jax.random.PRNGKey(0)
    ks = jax.random.split(key, 10)

    # img_ev_fusion(num_channels=4); small demo shapes.
    N, C, H, W = 2, 4, 16, 16
    ev = jax.random.normal(ks[0], (N, C, H, W), jnp.float32)
    feat_0 = jax.random.normal(ks[1], (N, C, H, W), jnp.float32)
    feat_1 = jax.random.normal(ks[2], (N, C, H, W), jnp.float32)
    # Deterministic synthetic conv1x1 parameters (not a checkpoint).
    se0_w = jax.random.normal(ks[3], (C, C, 1, 1), jnp.float32) / jnp.sqrt(C)
    se0_b = jax.random.normal(ks[4], (C,), jnp.float32) * 0.1
    se1_w = jax.random.normal(ks[5], (C, C, 1, 1), jnp.float32) / jnp.sqrt(C)
    se1_b = jax.random.normal(ks[6], (C,), jnp.float32) * 0.1

    ref = _reference(ev, feat_0, feat_1, se0_w, se0_b, se1_w, se1_b)

    # Auto-sized lane tile (single tile at this tiny spatial size).
    out = img_ev_fusion_forward(ev, feat_0, feat_1, se0_w, se0_b, se1_w, se1_b)
    out = jax.block_until_ready(out)
    assert out.shape == (N, C, H, W), out.shape
    assert jnp.allclose(out, ref, atol=1e-5, rtol=1e-5), \
        float(jnp.max(jnp.abs(out - ref)))

    # Forced multi-tile grid: exercises the streamed pool accumulator and the
    # pipelined "parallel" fusion grid (the path taken at realistic H*W).
    out_tiled = img_ev_fusion_forward(ev, feat_0, feat_1, se0_w, se0_b,
                                      se1_w, se1_b, lane_tile=128)
    out_tiled = jax.block_until_ready(out_tiled)
    assert jnp.allclose(out_tiled, ref, atol=1e-5, rtol=1e-5), \
        float(jnp.max(jnp.abs(out_tiled - ref)))

    # Ragged spatial extent: exercises the host-side pad-to-128 path.
    Hr, Wr = 10, 10
    ev_r = jax.random.normal(ks[7], (N, C, Hr, Wr), jnp.float32)
    f0_r = jax.random.normal(ks[8], (N, C, Hr, Wr), jnp.float32)
    f1_r = jax.random.normal(ks[9], (N, C, Hr, Wr), jnp.float32)
    ref_r = _reference(ev_r, f0_r, f1_r, se0_w, se0_b, se1_w, se1_b)
    out_r = img_ev_fusion_forward(ev_r, f0_r, f1_r, se0_w, se0_b, se1_w, se1_b)
    out_r = jax.block_until_ready(out_r)
    assert out_r.shape == (N, C, Hr, Wr), out_r.shape
    assert jnp.allclose(out_r, ref_r, atol=1e-5, rtol=1e-5), \
        float(jnp.max(jnp.abs(out_r - ref_r)))

    print("KERNEL_OK")
</pallas_src>

<mosaic_0001>
module attributes {stable_mosaic.version = 11 : i64} {
  func.func @_se_pool_gates_kernel(%arg0: i32, %arg1: memref<2x4x256xf32, #tpu.memory_space<vmem>>, %arg2: memref<4x8xf32, #tpu.memory_space<vmem>>, %arg3: memref<1x8xf32, #tpu.memory_space<vmem>>, %arg4: memref<2x4xf32, #tpu.memory_space<vmem>>, %arg5: memref<2x4xf32, #tpu.memory_space<vmem>>, %arg6: memref<2x4x256xf32, #tpu.memory_space<vmem>>) attributes {dimension_semantics = [#tpu.dimension_semantics<arbitrary>], iteration_bounds = array<i64: 1>, scalar_prefetch = 0 : i64, scratch_operands = 1 : i64, tpu.core_type = #tpu.core_type<tc>, window_params = [{transform_indices = @transform_0, window_bounds = array<i64: 2, 4, 256>}, {pipeline_mode = #tpu.pipeline_mode<synchronous>, transform_indices = @transform_1, window_bounds = array<i64: 4, 8>}, {pipeline_mode = #tpu.pipeline_mode<synchronous>, transform_indices = @transform_2, window_bounds = array<i64: 1, 8>}, {pipeline_mode = #tpu.pipeline_mode<synchronous>, transform_indices = @transform_3, window_bounds = array<i64: 2, 4>}, {pipeline_mode = #tpu.pipeline_mode<synchronous>, transform_indices = @transform_4, window_bounds = array<i64: 2, 4>}]} {
    %c0_i32 = arith.constant 0 : i32
    %0 = arith.cmpi eq, %arg0, %c0_i32 : i32
    %1 = arith.extui %0 : i1 to i32
    %c0_i32_0 = arith.constant 0 : i32
    %2 = arith.cmpi ne, %1, %c0_i32_0 : i32
    scf.if %2 {
      %cst = arith.constant 0.000000e+00 : f32
      %10 = vector.broadcast %cst : f32 to vector<2x4x256xf32>
      %c0_11 = arith.constant 0 : index
      %c0_12 = arith.constant 0 : index
      %c0_13 = arith.constant 0 : index
      %11 = vector.load %arg6[%c0_11, %c0_12, %c0_13] : memref<2x4x256xf32, #tpu.memory_space<vmem>>, vector<2x4x256xf32>
      tpu.vector_store %arg6[%c0_11, %c0_12, %c0_13], %10 {strides = array<i32>} : memref<2x4x256xf32, #tpu.memory_space<vmem>>, vector<2x4x256xf32>,
    } else {
    }
    %c0 = arith.constant 0 : index
    %c0_1 = arith.constant 0 : index
    %c0_2 = arith.constant 0 : index
    %3 = vector.load %arg6[%c0, %c0_1, %c0_2] : memref<2x4x256xf32, #tpu.memory_space<vmem>>, vector<2x4x256xf32>
    %c0_3 = arith.constant 0 : index
    %c0_4 = arith.constant 0 : index
    %c0_5 = arith.constant 0 : index
    %4 = vector.load %arg1[%c0_3, %c0_4, %c0_5] : memref<2x4x256xf32, #tpu.memory_space<vmem>>, vector<2x4x256xf32>
    %5 = arith.addf %3, %4 : vector<2x4x256xf32>
    %c0_6 = arith.constant 0 : index
    %c0_7 = arith.constant 0 : index
    %c0_8 = arith.constant 0 : index
    %6 = vector.load %arg6[%c0_6, %c0_7, %c0_8] : memref<2x4x256xf32, #tpu.memory_space<vmem>>, vector<2x4x256xf32>
    tpu.vector_store %arg6[%c0_6, %c0_7, %c0_8], %5 {strides = array<i32>} : memref<2x4x256xf32, #tpu.memory_space<vmem>>, vector<2x4x256xf32>,
    %c0_i32_9 = arith.constant 0 : i32
    %7 = arith.cmpi eq, %arg0, %c0_i32_9 : i32
    %8 = arith.extui %7 : i1 to i32
    %c0_i32_10 = arith.constant 0 : i32
    %9 = arith.cmpi ne, %8, %c0_i32_10 : i32
    scf.if %9 {
      %c0_11 = arith.constant 0 : index
      %c0_12 = arith.constant 0 : index
      %c0_13 = arith.constant 0 : index
      %10 = vector.load %arg6[%c0_11, %c0_12, %c0_13] : memref<2x4x256xf32, #tpu.memory_space<vmem>>, vector<2x4x256xf32>
      %cst = arith.constant dense<0.000000e+00> : vector<2x4xf32>
      %11 = vector.multi_reduction <add>, %10, %cst [2] : vector<2x4x256xf32> to vector<2x4xf32>
      %cst_14 = arith.constant 3.906250e-03 : f32
      %12 = vector.broadcast %cst_14 : f32 to vector<2x4xf32>
      %13 = arith.mulf %11, %12 : vector<2x4xf32>
      %c0_15 = arith.constant 0 : index
      %c0_16 = arith.constant 0 : index
      %14 = vector.load %arg2[%c0_15, %c0_16] : memref<4x8xf32, #tpu.memory_space<vmem>>, vector<4x8xf32>
      %c0_17 = arith.constant 0 : index
      %c0_18 = arith.constant 0 : index
      %15 = vector.load %arg3[%c0_17, %c0_18] : memref<1x8xf32, #tpu.memory_space<vmem>>, vector<1x8xf32>
      %16 = vector.extract_strided_slice %13 {offsets = [0, 0], sizes = [2, 1], strides = [1, 1]} : vector<2x4xf32> to vector<2x1xf32>
      %17 = vector.extract_strided_slice %14 {offsets = [0, 0], sizes = [1, 8], strides = [1, 1]} : vector<4x8xf32> to vector<1x8xf32>
      %18 = vector.broadcast %16 : vector<2x1xf32> to vector<2x8xf32>
      %19 = vector.broadcast %17 : vector<1x8xf32> to vector<2x8xf32>
      %20 = arith.mulf %18, %19 : vector<2x8xf32>
      %21 = vector.broadcast %15 : vector<1x8xf32> to vector<2x8xf32>
      %22 = arith.addf %21, %20 : vector<2x8xf32>
      %23 = vector.extract_strided_slice %13 {offsets = [0, 1], sizes = [2, 1], strides = [1, 1]} : vector<2x4xf32> to vector<2x1xf32>
      %24 = vector.extract_strided_slice %14 {offsets = [1, 0], sizes = [1, 8], strides = [1, 1]} : vector<4x8xf32> to vector<1x8xf32>
      %25 = vector.broadcast %23 : vector<2x1xf32> to vector<2x8xf32>
      %26 = vector.broadcast %24 : vector<1x8xf32> to vector<2x8xf32>
      %27 = arith.mulf %25, %26 : vector<2x8xf32>
      %28 = arith.addf %22, %27 : vector<2x8xf32>
      %29 = vector.extract_strided_slice %13 {offsets = [0, 2], sizes = [2, 1], strides = [1, 1]} : vector<2x4xf32> to vector<2x1xf32>
      %30 = vector.extract_strided_slice %14 {offsets = [2, 0], sizes = [1, 8], strides = [1, 1]} : vector<4x8xf32> to vector<1x8xf32>
      %31 = vector.broadcast %29 : vector<2x1xf32> to vector<2x8xf32>
      %32 = vector.broadcast %30 : vector<1x8xf32> to vector<2x8xf32>
      %33 = arith.mulf %31, %32 : vector<2x8xf32>
      %34 = arith.addf %28, %33 : vector<2x8xf32>
      %35 = vector.extract_strided_slice %13 {offsets = [0, 3], sizes = [2, 1], strides = [1, 1]} : vector<2x4xf32> to vector<2x1xf32>
      %36 = vector.extract_strided_slice %14 {offsets = [3, 0], sizes = [1, 8], strides = [1, 1]} : vector<4x8xf32> to vector<1x8xf32>
      %37 = vector.broadcast %35 : vector<2x1xf32> to vector<2x8xf32>
      %38 = vector.broadcast %36 : vector<1x8xf32> to vector<2x8xf32>
      %39 = arith.mulf %37, %38 : vector<2x8xf32>
      %40 = arith.addf %34, %39 : vector<2x8xf32>
      %cst_19 = arith.constant 0.000000e+00 : f32
      %41 = vector.broadcast %cst_19 : f32 to vector<2x8xf32>
      %42 = arith.subf %41, %40 : vector<2x8xf32>
      %43 = math.exp %42 : vector<2x8xf32>
      %cst_20 = arith.constant 1.000000e+00 : f32
      %44 = vector.broadcast %cst_20 : f32 to vector<2x8xf32>
      %45 = arith.addf %44, %43 : vector<2x8xf32>
      %cst_21 = arith.constant 1.000000e+00 : f32
      %46 = vector.broadcast %cst_21 : f32 to vector<2x8xf32>
      %47 = arith.divf %46, %45 : vector<2x8xf32>
      %48 = vector.extract_strided_slice %47 {offsets = [0, 0], sizes = [2, 4], strides = [1, 1]} : vector<2x8xf32> to vector<2x4xf32>
      %c0_22 = arith.constant 0 : index
      %c0_23 = arith.constant 0 : index
      %49 = vector.load %arg4[%c0_22, %c0_23] : memref<2x4xf32, #tpu.memory_space<vmem>>, vector<2x4xf32>
      tpu.vector_store %arg4[%c0_22, %c0_23], %48 {strides = array<i32>} : memref<2x4xf32, #tpu.memory_space<vmem>>, vector<2x4xf32>,
      %50 = vector.extract_strided_slice %47 {offsets = [0, 4], sizes = [2, 4], strides = [1, 1]} : vector<2x8xf32> to vector<2x4xf32>
      %c0_24 = arith.constant 0 : index
      %c0_25 = arith.constant 0 : index
      %51 = vector.load %arg5[%c0_24, %c0_25] : memref<2x4xf32, #tpu.memory_space<vmem>>, vector<2x4xf32>
      tpu.vector_store %arg5[%c0_24, %c0_25], %50 {strides = array<i32>} : memref<2x4xf32, #tpu.memory_space<vmem>>, vector<2x4xf32>,
    } else {
    }
    return
  }
  func.func @transform_0(%arg0: i32) -> (i32, i32, i32) {
    %c0_i32 = arith.constant 0 : i32
    %c0_i32_0 = arith.constant 0 : i32
    %c0_i32_1 = arith.constant 0 : i32
    return %c0_i32, %c0_i32_0, %arg0 : i32, i32, i32
  }
  func.func @transform_1(%arg0: i32) -> (i32, i32) {
    %c0_i32 = arith.constant 0 : i32
    %c0_i32_0 = arith.constant 0 : i32
    %c0_i32_1 = arith.constant 0 : i32
    return %c0_i32, %c0_i32_0 : i32, i32
  }
  func.func @transform_2(%arg0: i32) -> (i32, i32) {
    %c0_i32 = arith.constant 0 : i32
    %c0_i32_0 = arith.constant 0 : i32
    %c0_i32_1 = arith.constant 0 : i32
    return %c0_i32, %c0_i32_0 : i32, i32
  }
  func.func @transform_3(%arg0: i32) -> (i32, i32) {
    %c0_i32 = arith.constant 0 : i32
    %c0_i32_0 = arith.constant 0 : i32
    %c0_i32_1 = arith.constant 0 : i32
    return %c0_i32, %c0_i32_0 : i32, i32
  }
  func.func @transform_4(%arg0: i32) -> (i32, i32) {
    %c0_i32 = arith.constant 0 : i32
    %c0_i32_0 = arith.constant 0 : i32
    %c0_i32_1 = arith.constant 0 : i32
    return %c0_i32, %c0_i32_0 : i32, i32
  }
}

</mosaic_0001>

<llo_original>
// kernel: tpu_custom_call.1
$region0: #{tpu_custom_call.1}
  #allocation0 [shape = 'u32[]', space=smem, size = 0x4, offset = 0x4, fixed_abs, tag = 'smem constant byte address 0x4 - core index']
  #allocation1 [shape = 'u32[144,128]{1,0:T(1,128)}', space=vmem, size = 0x12000, scoped, tag = 'internal scratch']
  #allocation2 [shape = 'f32[2,4,256]{2,1,0:T(4,128)}', space=vmem, size = 0x2000, scoped, tag = 'scratch operand']
  %s0 = inlined_call_operand.hbm [shape: f32[2,4,256], index: 0, kind: input, shape index: {}]
  %s1 = inlined_call_operand.hbm [shape: f32[4,8], index: 1, kind: input, shape index: {}]
  %s2 = inlined_call_operand.vmem [shape: f32[1,8], index: 2, kind: input, shape index: {}]
  %s3 = inlined_call_operand.hbm [shape: f32[2,4], index: 3, kind: output, shape index: {0}]
  %s4 = inlined_call_operand.hbm [shape: f32[2,4], index: 4, kind: output, shape index: {1}]
  %5 = xla_tuple %s3, %s4
  %s6 = sld [smem:[#allocation0]]
  $region46: #{tpu_custom_call.1} parent=0
    _
  %s8 = ssub.s32 1, %s6
  %s9 = scalar_select 0, %s8, %s6
  $region1: #{tpu_custom_call.1} parent=0
    #allocation3 [shape = 'u8[8192]{0}', space=vmem, size = 0x2000, scoped, tag = 'input window, operand 0, single buffered']
    #allocation4 [shape = 's32[1]{0}', space=sflag, size = 0x4, scoped, tag = 'scoped memory for tpu_custom_call.1']
    #allocation5 [shape = 's32[1]{0}', space=sflag, size = 0x4, scoped, tag = 'scoped memory for tpu_custom_call.1']
    #allocation6 [shape = 'u8[2048]{0}', space=vmem, size = 0x800, scoped, tag = 'input window, operand 1, single buffered']
    #allocation7 [shape = 's32[1]{0}', space=sflag, size = 0x4, scoped, tag = 'scoped memory for tpu_custom_call.1']
    #allocation8 [shape = 'u8[1024]{0}', space=vmem, size = 0x400, scoped, tag = 'output window, operand 0, single buffered']
    #allocation9 [shape = 'u8[1024]{0}', space=vmem, size = 0x400, scoped, tag = 'output window, operand 1, single buffered']
    #allocation10 [shape = 's32[1]{0}', space=sflag, size = 0x4, scoped, tag = 'scoped memory for tpu_custom_call.1']
    %10 = vsyncpa [#allocation4], 0
    %11 = vsyncpa [#allocation7], 0
    %12 = vsyncpa [#allocation5], 0
    %13 = vsyncpa [#allocation10], 0
    // Predicated region
    $region2: #{tpu_custom_call.1} parent=1 // pred_check
      _
    $region3: #{tpu_custom_call.1} parent=1 // pred_check_branch
      %15 = sbr.rel (0) target = $region5
    $region4: #{tpu_custom_call.1} parent=1 // pred_region
      %s17 = ssub.s32 256, 256
      %18 = vsyncadd [#allocation4], %s17
      %s19 = sshll.u32 [#allocation3], 4
      %s20 = int_to_ptr.vmem [resolvable:$true] %s19
      %25 = dma.hbm_to_vmem [thread:$0]  %s0, 256, %s20, [#allocation4], 128, 128, 8
    $region5: #{tpu_custom_call.1} parent=1 // pred_fallthru
      _
    // Predicated region
    $region6: #{tpu_custom_call.1} parent=1 // pred_check
      _
    $region7: #{tpu_custom_call.1} parent=1 // pred_check_branch
      %27 = sbr.rel (0) target = $region9
    $region8: #{tpu_custom_call.1} parent=1 // pred_region
      %s29 = ssub.s32 64, 64
      %30 = vsyncadd [#allocation7], %s29
      %s32 = sshll.u32 [#allocation6], 4
      %s33 = int_to_ptr.vmem [resolvable:$true] %s32
      %35 = dma.hbm_to_vmem [thread:$0]  %s1, 64, %s33, [#allocation7]
    $region9: #{tpu_custom_call.1} parent=1 // pred_fallthru
      _
    // Predicated region
    $region10: #{tpu_custom_call.1} parent=1 // pred_check
      _
    $region11: #{tpu_custom_call.1} parent=1 // pred_check_branch
      %37 = sbr.rel (0) target = $region13
    $region12: #{tpu_custom_call.1} parent=1 // pred_region
      _
    $region13: #{tpu_custom_call.1} parent=1 // pred_fallthru
      _
    // Predicated region
    $region14: #{tpu_custom_call.1} parent=1 // pred_check
      _
    $region15: #{tpu_custom_call.1} parent=1 // pred_check_branch
      %39 = sbr.rel (0) target = $region17
    $region16: #{tpu_custom_call.1} parent=1 // pred_region
      %40 = dma.done [#allocation4], 256
    $region17: #{tpu_custom_call.1} parent=1 // pred_fallthru
      _
    // Predicated region
    $region18: #{tpu_custom_call.1} parent=1 // pred_check
      _
    $region19: #{tpu_custom_call.1} parent=1 // pred_check_branch
      %42 = sbr.rel (0) target = $region21
    $region20: #{tpu_custom_call.1} parent=1 // pred_region
      %43 = dma.done [#allocation7], 64
    $region21: #{tpu_custom_call.1} parent=1 // pred_fallthru
      _
    %p44 = scmp.eq.s32.totalorder 0, 0
    // Predicated region
    $region22: #{tpu_custom_call.1} parent=1 // pred_check
      %p45 = pneg %p44
    $region23: #{tpu_custom_call.1} parent=1 // pred_check_branch
      %47 = sbr.rel (%p45) target = $region25
    $region24: #{tpu_custom_call.1} parent=1 // pred_region
      %48 = vst [vmem:[#allocation2] sm:$0xff] 0.0
      %49 = vst [vmem:[#allocation2 + $0x8] sm:$0xff] 0.0
    $region25: #{tpu_custom_call.1} parent=1 // pred_fallthru
      _
    %v50 = vld [vmem:[#allocation2] sm:$0xff]
    %v51 = vld [vmem:[#allocation2 + $0x8] sm:$0xff]
    %v52 = vld [vmem:[#allocation3] sm:$0xff]
    %v53 = vld [vmem:[#allocation3 + $0x8] sm:$0xff]
    %v54 = vadd.f32 %v50, %v52
    %v55 = vadd.f32 %v51, %v53
    %56 = vst [vmem:[#allocation2] sm:$0xff] %v54
    %57 = vst [vmem:[#allocation2 + $0x8] sm:$0xff] %v55
    // Predicated region
    $region26: #{tpu_custom_call.1} parent=1 // pred_check
      %p58 = pneg %p44
    $region27: #{tpu_custom_call.1} parent=1 // pred_check_branch
      %60 = sbr.rel (%p58) target = $region29
    $region28: #{tpu_custom_call.1} parent=1 // pred_region
      %v61 = vld [vmem:[#allocation2] sm:$0xff]
      %v62 = vld [vmem:[#allocation2 + $0x8] sm:$0xff]
      %v65 = vcombine.high %v61, %v61
      %v66 = vcombine.high %v62, %v62
      %vm69 = vcmask 1043456
      %v70 = vsel %vm69, %v61, 0.0
      %v71 = vsel %vm69, %v65, 0.0
      %v72 = vadd.f32 %v70, %v71
      %73 = vadd.xlane.f32.xlu0 %v72
      %v74 = vpop.xlane.xlu0 %73
      %v75 = vsel %vm69, %v62, 0.0
      %v76 = vsel %vm69, %v66, 0.0
      %v77 = vadd.f32 %v75, %v76
      %78 = vadd.xlane.f32.xlu0 %v77
      %v79 = vpop.xlane.xlu0 %78
      %v80 = vmul.f32 %v74, 0.00390625
      %v81 = vmul.f32 %v79, 0.00390625
      %v82 = vld [vmem:[#allocation6] sm:$0xf]
      %v83 = vld [vmem:[%s2] sm:$0x1]
      %v84 = vlaneseq
      %v85 = vshrl.u32 %v84, 7
      %v86 = vsub.s32 0, %v85
      %v87 = vrot.slane %v80, %v86
      %v88 = vlaneseq
      %v89 = vshrl.u32 %v88, 7
      %v90 = vsub.s32 0, %v89
      %v91 = vrot.slane %v81, %v90
      %v92 = vlaneseq
      %v93 = vshrl.u32 %v92, 7
      %v94 = vsub.s32 0, %v93
      %v95 = vrot.slane %v82, %v94
      %98 = vbcast.lane.b32.xlu0 %v95, 256
      %v99 = vpop.permute.xlu0 %98
      %v101 = vmul.f32 %v87, %v99
      %v102 = vmul.f32 %v91, %v99
      %v104 = vlaneseq
      %v105 = vshrl.u32 %v104, 7
      %v106 = vsub.s32 0, %v105
      %v107 = vrot.slane %v83, %v106
      %111 = vset.pattern.permute.xlu0 0
      %112 = vperm.xlu0 %111, %v101
      %v113 = vpop.permute.xlu0 %112
      %114 = vset.pattern.permute.xlu0 0
      %115 = vperm.xlu0 %114, %v102
      %v116 = vpop.permute.xlu0 %115
      %v117 = vlaneseq
      %v118 = vand.u32 %v117, 127
      %v119 = vlaneseq
      %v120 = vshrl.u32 %v119, 7
      %v121 = vsub.s32 %v118, %v120
      %v122 = vrot.slane %v113, %v121
      %v123 = vlaneseq
      %v124 = vshrl.u32 %v123, 7
      %v125 = vsub.s32 %v118, %v124
      %v126 = vrot.slane %v116, %v125
      %vm127 = vcmask 1041409
      %v128 = vsel %vm127, %v126, %v122
      %v130 = vadd.f32 %v107, %v128
      %v131 = vlaneseq
      %v132 = vshrl.u32 %v131, 7
      %v133 = vsub.s32 1, %v132
      %v134 = vrot.slane %v80, %v133
      %v135 = vlaneseq
      %v136 = vshrl.u32 %v135, 7
      %v137 = vsub.s32 1, %v136
      %v138 = vrot.slane %v81, %v137
      %v139 = vlaneseq
      %v140 = vshrl.u32 %v139, 7
      %v141 = vsub.s32 1, %v140
      %v142 = vrot.slane %v82, %v141
      %145 = vbcast.lane.b32.xlu0 %v142, 256
      %v146 = vpop.permute.xlu0 %145
      %v148 = vmul.f32 %v134, %v146
      %v149 = vmul.f32 %v138, %v146
      %152 = vset.pattern.permute.xlu0 0
      %153 = vperm.xlu0 %152, %v148
      %v154 = vpop.permute.xlu0 %153
      %155 = vset.pattern.permute.xlu0 0
      %156 = vperm.xlu0 %155, %v149
      %v157 = vpop.permute.xlu0 %156
      %v158 = vlaneseq
      %v159 = vshrl.u32 %v158, 7
      %v160 = vsub.s32 %v118, %v159
      %v161 = vrot.slane %v154, %v160
      %v162 = vlaneseq
      %v163 = vshrl.u32 %v162, 7
      %v164 = vsub.s32 %v118, %v163
      %v165 = vrot.slane %v157, %v164
      %v166 = vsel %vm127, %v165, %v161
      %v168 = vadd.f32 %v130, %v166
      %v169 = vlaneseq
      %v170 = vshrl.u32 %v169, 7
      %v171 = vsub.s32 2, %v170
      %v172 = vrot.slane %v80, %v171
      %v173 = vlaneseq
      %v174 = vshrl.u32 %v173, 7
      %v175 = vsub.s32 2, %v174
      %v176 = vrot.slane %v81, %v175
      %v177 = vlaneseq
      %v178 = vshrl.u32 %v177, 7
      %v179 = vsub.s32 2, %v178
      %v180 = vrot.slane %v82, %v179
      %183 = vbcast.lane.b32.xlu0 %v180, 256
      %v184 = vpop.permute.xlu0 %183
      %v186 = vmul.f32 %v172, %v184
      %v187 = vmul.f32 %v176, %v184
      %190 = vset.pattern.permute.xlu0 0
      %191 = vperm.xlu0 %190, %v186
      %v192 = vpop.permute.xlu0 %191
      %193 = vset.pattern.permute.xlu0 0
      %194 = vperm.xlu0 %193, %v187
      %v195 = vpop.permute.xlu0 %194
      %v196 = vlaneseq
      %v197 = vshrl.u32 %v196, 7
      %v198 = vsub.s32 %v118, %v197
      %v199 = vrot.slane %v192, %v198
      %v200 = vlaneseq
      %v201 = vshrl.u32 %v200, 7
      %v202 = vsub.s32 %v118, %v201
      %v203 = vrot.slane %v195, %v202
      %v204 = vsel %vm127, %v203, %v199
      %v206 = vadd.f32 %v168, %v204
      %v207 = vlaneseq
      %v208 = vshrl.u32 %v207, 7
      %v209 = vsub.s32 3, %v208
      %v210 = vrot.slane %v80, %v209
      %v211 = vlaneseq
      %v212 = vshrl.u32 %v211, 7
      %v213 = vsub.s32 3, %v212
      %v214 = vrot.slane %v81, %v213
      %v215 = vlaneseq
      %v216 = vshrl.u32 %v215, 7
      %v217 = vsub.s32 3, %v216
      %v218 = vrot.slane %v82, %v217
      %221 = vbcast.lane.b32.xlu0 %v218, 256
      %v222 = vpop.permute.xlu0 %221
      %v224 = vmul.f32 %v210, %v222
      %v225 = vmul.f32 %v214, %v222
      %228 = vset.pattern.permute.xlu0 0
      %229 = vperm.xlu0 %228, %v224
      %v230 = vpop.permute.xlu0 %229
      %231 = vset.pattern.permute.xlu0 0
      %232 = vperm.xlu0 %231, %v225
      %v233 = vpop.permute.xlu0 %232
      %v234 = vlaneseq
      %v235 = vshrl.u32 %v234, 7
      %v236 = vsub.s32 %v118, %v235
      %v237 = vrot.slane %v230, %v236
      %v238 = vlaneseq
      %v239 = vshrl.u32 %v238, 7
      %v240 = vsub.s32 %v118, %v239
      %v241 = vrot.slane %v233, %v240
      %v242 = vsel %vm127, %v241, %v237
      %v244 = vadd.f32 %v206, %v242
      %v245 = vsub.f32 0.0, %v244
      %v246 = vmul.f32 %v245, 1.442695
      %v247 = vpow.pop %v246
      %v248 = vadd.f32 %v247, 1.0
      %v249 = vrcp.pop %v248
      %v250 = vmul.f32 1.0, %v249
      %vm251 = vcmask 25600
      %252 = vst.msk [vmem:[#allocation8] sm:$0x3] %vm251, %v250
      %254 = vrot.lane.b32.xlu0 %v250, 124
      %v255 = vpop.permute.xlu0 %254
      %257 = vst.msk [vmem:[#allocation9] sm:$0x3] %vm251, %v255
    $region29: #{tpu_custom_call.1} parent=1 // pred_fallthru
      _
    // Predicated region
    $region30: #{tpu_custom_call.1} parent=1 // pred_check
      _
    $region31: #{tpu_custom_call.1} parent=1 // pred_check_branch
      %259 = sbr.rel (0) target = $region33
    $region32: #{tpu_custom_call.1} parent=1 // pred_region
      %s261 = ssub.s32 32, 32
      %262 = vsyncadd [#allocation5], %s261
      %s264 = sshll.u32 [#allocation8], 4
      %s265 = int_to_ptr.vmem [resolvable:$true] %s264
      %267 = dma.vmem_to_hbm [thread:$0]  %s265, 32, %s3, [#allocation5]
    $region33: #{tpu_custom_call.1} parent=1 // pred_fallthru
      _
    // Predicated region
    $region34: #{tpu_custom_call.1} parent=1 // pred_check
      _
    $region35: #{tpu_custom_call.1} parent=1 // pred_check_branch
      %269 = sbr.rel (0) target = $region37
    $region36: #{tpu_custom_call.1} parent=1 // pred_region
      %s271 = ssub.s32 32, 32
      %272 = vsyncadd [#allocation10], %s271
      %s274 = sshll.u32 [#allocation9], 4
      %s275 = int_to_ptr.vmem [resolvable:$true] %s274
      %277 = dma.vmem_to_hbm [thread:$0]  %s275, 32, %s4, [#allocation10]
    $region37: #{tpu_custom_call.1} parent=1 // pred_fallthru
      _
    // Predicated region
    $region38: #{tpu_custom_call.1} parent=1 // pred_check
      _
    $region39: #{tpu_custom_call.1} parent=1 // pred_check_branch
      %279 = sbr.rel (0) target = $region41
    $region40: #{tpu_custom_call.1} parent=1 // pred_region
      %280 = dma.done [#allocation5], 32
    $region41: #{tpu_custom_call.1} parent=1 // pred_fallthru
      _
    // Predicated region
    $region42: #{tpu_custom_call.1} parent=1 // pred_check
      _
    $region43: #{tpu_custom_call.1} parent=1 // pred_check_branch
      %282 = sbr.rel (0) target = $region45
    $region44: #{tpu_custom_call.1} parent=1 // pred_region
      %283 = dma.done [#allocation10], 32
    $region45: #{tpu_custom_call.1} parent=1 // pred_fallthru
      _
    %284 = vsyncpa [#allocation4], 1
    %285 = vsyncpa [#allocation7], 1
    %286 = vsyncpa [#allocation5], 1
    %287 = vsyncpa [#allocation10], 1

</llo_original>
